<compile_context>
chip_gen: v7x
topology: tpu7x:2x2x1
jax: 0.10.0
libtpu: 0.0.40
codegen_flags: <defaults>
</compile_context>

<pallas_src>
import jax
import jax.numpy as jnp
from jax.experimental import pallas as pl
from jax.experimental.pallas import tpu as pltpu


def _folded_affine_kernel(x_ref, w_ref, b_ref, o_ref):
    # x_ref: [bt, F] (VMEM); w_ref: [1, F] (VMEM, broadcasts across sublanes);
    # b_ref: [1, 1] scalar in SMEM; o_ref: [bt, 1].
    x = x_ref[...].astype(jnp.float32)
    w = w_ref[...].astype(jnp.float32)
    # Final 1-wide "matmul" as VPU multiply + cross-lane (XLU) reduce, f32 accum.
    y = jnp.sum(x * w, axis=-1, keepdims=True) + b_ref[0, 0]
    o_ref[...] = y.astype(o_ref.dtype)


def fold_params(params):
    """Collapse the affine chain (inference: dropout = identity, no activations).

    params[f"l{k}"] = (w, b) with w: [in, out], b: [1, out]  (w transposed vs
    PyTorch's [out, in]).  Returns (w_all: [1, input_size], b_all: [1, 1]) in
    float32 such that  x @ w_all.T + b_all == layer5(...layer1(x)...).
    Call once offline for serving; do NOT call per inference request.
    """
    w_tot, b_tot = params["l1"]
    for name in ("l2", "l3", "l4", "l5"):
        w, b = params[name]
        b_tot = b_tot @ w + b
        w_tot = w_tot @ w
    return (w_tot.T.astype(jnp.float32),   # [1, input_size]
            b_tot.astype(jnp.float32))     # [1, 1]


def _round_up(n, m):
    return ((n + m - 1) // m) * m


def _pick_batch_tile(B, batch_tile):
    # Keep the grid >= 2 steps when possible (so v7x megacore sharding gives
    # both TensorCores work) and never drop below the 8-row sublane granule.
    bt = min(batch_tile, _round_up(max(B // 2, 1), 8))
    return max(bt, 8)


def aesthetic_predictor(x, w_all, b_all, *, batch_tile=1024):
    """x: [B, F] (f32 or bf16). w_all: [1, F], b_all: [1, 1] from fold_params().
    Returns [B, 1] float32."""
    B, F = x.shape
    assert w_all.shape == (1, F), w_all.shape
    assert b_all.shape == (1, 1), b_all.shape

    bt = _pick_batch_tile(B, batch_tile)
    grid = (pl.cdiv(B, bt),)   # ragged last block handled by Pallas (masked store)

    return pl.pallas_call(
        _folded_affine_kernel,
        out_shape=jax.ShapeDtypeStruct((B, 1), jnp.float32),
        grid_spec=pltpu.PrefetchScalarGridSpec(
            num_scalar_prefetch=0,
            grid=grid,
            in_specs=[
                pl.BlockSpec((bt, F), lambda i: (i, 0)),    # x tile (pipelined)
                pl.BlockSpec((1, F), lambda i: (0, 0)),     # folded weights (~3 KiB)
                pl.BlockSpec(memory_space=pltpu.MemorySpace.SMEM),  # folded bias scalar
            ],
            out_specs=pl.BlockSpec((bt, 1), lambda i: (i, 0)),
        ),
        compiler_params=pltpu.CompilerParams(
            dimension_semantics=("parallel",)),   # megacore sharding on v7x
    )(x, w_all, b_all)


def init_params(input_size, key):
    """PyTorch nn.Linear default init (U[-1/sqrt(fan_in), +1/sqrt(fan_in)]).
    Weights stored as [in, out] (transposed vs PyTorch's [out, in])."""
    dims = [(input_size, 1024), (1024, 128), (128, 64), (64, 16), (16, 1)]
    params = {}
    keys = jax.random.split(key, 2 * len(dims))
    for idx, (fan_in, fan_out) in enumerate(dims):
        bound = 1.0 / jnp.sqrt(jnp.float32(fan_in))
        w = jax.random.uniform(keys[2 * idx], (fan_in, fan_out),
                               minval=-bound, maxval=bound, dtype=jnp.float32)
        b = jax.random.uniform(keys[2 * idx + 1], (1, fan_out),
                               minval=-bound, maxval=bound, dtype=jnp.float32)
        params[f"l{idx + 1}"] = (w, b)
    return params


def reference_forward(x, params):
    # Layer-by-layer reference (matches the PyTorch forward at inference).
    h = x
    for name in ["l1", "l2", "l3", "l4", "l5"]:
        w, b = params[name]
        h = h @ w + b
    return h


if __name__ == "__main__":
    key = jax.random.PRNGKey(0)
    kp, kx = jax.random.split(key)

    INPUT_SIZE = 768   # CLIP embedding size used with this predictor
    BATCH = 300        # not a multiple of the tile -> exercises the ragged path

    params = init_params(INPUT_SIZE, kp)

    # Feed bf16 embeddings (halves HBM read for this read-bound kernel).
    x_bf16 = jax.random.normal(kx, (BATCH, INPUT_SIZE), dtype=jnp.float32).astype(jnp.bfloat16)

    # Fold once "offline", reuse across calls.
    w_all, b_all = fold_params(params)

    out = aesthetic_predictor(x_bf16, w_all, b_all)
    out = jax.block_until_ready(out)

    # Reference sees the same (bf16-quantized) input, upcast to f32; the only
    # numerical drift vs the layer-by-layer chain is the fold's summation order.
    ref = reference_forward(x_bf16.astype(jnp.float32), params)
    assert out.shape == (BATCH, 1), out.shape
    max_err = jnp.max(jnp.abs(out - ref))
    assert jnp.allclose(out, ref, atol=5e-4, rtol=1e-3), f"max abs err = {max_err}"

    print("KERNEL_OK")
</pallas_src>

<mosaic_0001>
module attributes {stable_mosaic.version = 11 : i64} {
  func.func @_folded_affine_kernel(%arg0: i32, %arg1: memref<152x768xbf16, #tpu.memory_space<vmem>>, %arg2: memref<1x768xf32, #tpu.memory_space<vmem>>, %arg3: memref<1x1xf32, #tpu.memory_space<smem>>, %arg4: memref<152x1xf32, #tpu.memory_space<vmem>>) attributes {dimension_semantics = [#tpu.dimension_semantics<parallel>], iteration_bounds = array<i64: 2>, scalar_prefetch = 0 : i64, scratch_operands = 0 : i64, tpu.core_type = #tpu.core_type<tc>, window_params = [{transform_indices = @transform_0, window_bounds = array<i64: 152, 768>}, {pipeline_mode = #tpu.pipeline_mode<synchronous>, transform_indices = @transform_1, window_bounds = array<i64: 1, 768>}, {transform_indices = @transform_2, window_bounds = array<i64: 1, 1>}, {transform_indices = @transform_3, window_bounds = array<i64: 152, 1>}]} {
    %c0 = arith.constant 0 : index
    %c0_0 = arith.constant 0 : index
    %0 = vector.load %arg1[%c0, %c0_0] : memref<152x768xbf16, #tpu.memory_space<vmem>>, vector<152x768xbf16>
    %1 = arith.extf %0 : vector<152x768xbf16> to vector<152x768xf32>
    %c0_1 = arith.constant 0 : index
    %c0_2 = arith.constant 0 : index
    %2 = vector.load %arg2[%c0_1, %c0_2] : memref<1x768xf32, #tpu.memory_space<vmem>>, vector<1x768xf32>
    %3 = vector.broadcast %2 : vector<1x768xf32> to vector<152x768xf32>
    %4 = arith.mulf %1, %3 : vector<152x768xf32>
    %cst = arith.constant dense<0.000000e+00> : vector<152xf32>
    %5 = vector.multi_reduction <add>, %4, %cst [1] : vector<152x768xf32> to vector<152xf32>
    %6 = vector.shape_cast %5 : vector<152xf32> to vector<152x1xf32>
    %c0_3 = arith.constant 0 : index
    %c0_4 = arith.constant 0 : index
    %7 = memref.load %arg3[%c0_3, %c0_4] : memref<1x1xf32, #tpu.memory_space<smem>>
    %8 = vector.broadcast %7 : f32 to vector<152x1xf32>
    %9 = arith.addf %6, %8 : vector<152x1xf32>
    %c0_5 = arith.constant 0 : index
    %c0_6 = arith.constant 0 : index
    %10 = vector.load %arg4[%c0_5, %c0_6] : memref<152x1xf32, #tpu.memory_space<vmem>>, vector<152x1xf32>
    tpu.vector_store %arg4[%c0_5, %c0_6], %9 {strides = array<i32>} : memref<152x1xf32, #tpu.memory_space<vmem>>, vector<152x1xf32>,
    return
  }
  func.func @transform_0(%arg0: i32) -> (i32, i32) {
    %c0_i32 = arith.constant 0 : i32
    %c0_i32_0 = arith.constant 0 : i32
    return %arg0, %c0_i32 : i32, i32
  }
  func.func @transform_1(%arg0: i32) -> (i32, i32) {
    %c0_i32 = arith.constant 0 : i32
    %c0_i32_0 = arith.constant 0 : i32
    %c0_i32_1 = arith.constant 0 : i32
    return %c0_i32, %c0_i32_0 : i32, i32
  }
  func.func @transform_2(%arg0: i32) -> (i32, i32) {
    %c0_i32 = arith.constant 0 : i32
    %c0_i32_0 = arith.constant 0 : i32
    %c0_i32_1 = arith.constant 0 : i32
    return %c0_i32, %c0_i32_0 : i32, i32
  }
  func.func @transform_3(%arg0: i32) -> (i32, i32) {
    %c0_i32 = arith.constant 0 : i32
    %c0_i32_0 = arith.constant 0 : i32
    return %arg0, %c0_i32 : i32, i32
  }
}

</mosaic_0001>

<llo_original>
// kernel: tpu_custom_call.1
$region0: #{tpu_custom_call.1}
  #allocation0 [shape = 'u32[]', space=smem, size = 0x4, offset = 0x4, fixed_abs, tag = 'smem constant byte address 0x4 - core index']
  #allocation1 [shape = 'u32[144,128]{1,0:T(1,128)}', space=vmem, size = 0x12000, scoped, tag = 'internal scratch']
  #allocation2 [shape = 'f32[1,1]{1,0:T(1,128)S(6)}', space=smem, size = 0x200, scoped, tag = 'scoped memory for tpu_custom_call.1']
  %s0 = inlined_call_operand.hbm [shape: bf16[300,768], index: 0, kind: input, shape index: {}]
  %s1 = inlined_call_operand.vmem [shape: f32[1,768], index: 1, kind: input, shape index: {}]
  %s2 = inlined_call_operand.<no memory space> [shape: f32[1,1], index: 2, kind: input, shape index: {}]
  %s3 = inlined_call_operand.vmem [shape: f32[300,1], index: 3, kind: output, shape index: {}]
  %s4 = sld [smem:[#allocation0]]
  $region49: #{tpu_custom_call.1} parent=0
    _
  %s6 = ssub.s32 1, %s4
  %s7 = scalar_select 0, %s6, %s4
  %8 = sst [smem:[#allocation2]] %s2
  $region1: #{tpu_custom_call.1} parent=0
    #allocation3 [shape = 'u8[466944]{0}', space=vmem, size = 0x72000, scoped, tag = 'input window, operand 0']
    #allocation4 [shape = 's32[2]{0}', space=sflag, size = 0x8, scoped, tag = 'scoped memory for tpu_custom_call.1']
    %9 = vsyncpa [#allocation4], 0
    %s10 = scalar_lea.sflag [#allocation4], 1
    %11 = vsyncpa %s10, 0
    loop: start=0, step=1, limit=4
    $region2: #{tpu_custom_call.1} parent=1 // loop_pre_header
      _
    $region3: #{tpu_custom_call.1} parent=1 // loop_header
      %s13 = sphi 0, %s17
      %p14 = scmp.ge.s32.totalorder %s13, 4
      %s23 = sphi 0, %s25
      %s26 = sphi 0, %s23
      %s27 = sphi 0, %s26
      %s43 = sphi 0, %s27
      %s47 = sphi 0, %s47
      %s49 = sphi 0, %s47
      %s50 = sphi 0, %s49
      %s64 = sphi 0, %s50
      %s68 = sphi 0, %s68
      %s70 = sphi 0, %s68
      %s71 = sphi 0, %s70
      %s85 = sphi 0, %s71
      %s91 = sphi 0, %s93
      %s94 = sphi 0, %s91
      %s95 = sphi 0, %s94
      %s111 = sphi 0, %s95
    $region4: #{tpu_custom_call.1} parent=1 // loop_header_branch
      %16 = sbr.rel (%p14) target = $region8
    $region5: #{tpu_custom_call.1} parent=1 // loop_body
      %s18 = ssub.s32 %s13, 1
      %s19 = ssub.s32 %s13, 2
      %s20 = sadd.s32 %s13, 1
      %s21 = ssub.s32 %s13, %s20
      %p22 = scmp.eq.s32.totalorder %s21, 0
      %s24 = sadd.s32 %s23, 1
      %s25 = scalar_select %p22, %s23, %s24
      %p28 = pneg %p22
      %p29 = scmp.eq.s32.totalorder %s13, 1
      %p30 = por %p28, %p29
      %p31 = scmp.ne.s32.totalorder %s23, %s26
      %p32 = scmp.eq.s32.totalorder %s13, 0
      %p33 = por %p31, %p32
      %p34 = scmp.ne.s32.totalorder %s23, %s26
      %p35 = scmp.eq.s32.totalorder %s18, 1
      %p36 = por %p34, %p35
      %p37 = scmp.ne.s32.totalorder %s26, %s27
      %p38 = scmp.eq.s32.totalorder %s18, 0
      %p39 = por %p37, %p38
      %p40 = scmp.ne.s32.totalorder %s26, %s27
      %p41 = scmp.eq.s32.totalorder %s19, 1
      %p42 = por %p40, %p41
      %p44 = scmp.ne.s32.totalorder %s27, %s43
      %p45 = scmp.eq.s32.totalorder %s19, 0
      %p46 = por %p44, %p45
      %s48 = sadd.s32 %s47, 1
      %p51 = scmp.eq.s32.totalorder %s13, 1
      %p52 = scmp.ne.s32.totalorder %s47, %s49
      %p53 = scmp.eq.s32.totalorder %s13, 0
      %p54 = por %p52, %p53
      %p55 = scmp.ne.s32.totalorder %s47, %s49
      %p56 = scmp.eq.s32.totalorder %s18, 1
      %p57 = por %p55, %p56
      %p58 = scmp.ne.s32.totalorder %s49, %s50
      %p59 = scmp.eq.s32.totalorder %s18, 0
      %p60 = por %p58, %p59
      %p61 = scmp.ne.s32.totalorder %s49, %s50
      %p62 = scmp.eq.s32.totalorder %s19, 1
      %p63 = por %p61, %p62
      %p65 = scmp.ne.s32.totalorder %s50, %s64
      %p66 = scmp.eq.s32.totalorder %s19, 0
      %p67 = por %p65, %p66
      %s69 = sadd.s32 %s68, 1
      %p72 = scmp.eq.s32.totalorder %s13, 1
      %p73 = scmp.ne.s32.totalorder %s68, %s70
      %p74 = scmp.eq.s32.totalorder %s13, 0
      %p75 = por %p73, %p74
      %p76 = scmp.ne.s32.totalorder %s68, %s70
      %p77 = scmp.eq.s32.totalorder %s18, 1
      %p78 = por %p76, %p77
      %p79 = scmp.ne.s32.totalorder %s70, %s71
      %p80 = scmp.eq.s32.totalorder %s18, 0
      %p81 = por %p79, %p80
      %p82 = scmp.ne.s32.totalorder %s70, %s71
      %p83 = scmp.eq.s32.totalorder %s19, 1
      %p84 = por %p82, %p83
      %p86 = scmp.ne.s32.totalorder %s71, %s85
      %p87 = scmp.eq.s32.totalorder %s19, 0
      %p88 = por %p86, %p87
      %s89 = ssub.s32 %s13, %s20
      %p90 = scmp.eq.s32.totalorder %s89, 0
      %s92 = sadd.s32 %s91, 1
      %s93 = scalar_select %p90, %s91, %s92
      %p96 = pneg %p90
      %p97 = scmp.eq.s32.totalorder %s13, 1
      %p98 = por %p96, %p97
      %p99 = scmp.ne.s32.totalorder %s91, %s94
      %p100 = scmp.eq.s32.totalorder %s13, 0
      %p101 = por %p99, %p100
      %p102 = scmp.ne.s32.totalorder %s91, %s94
      %p103 = scmp.eq.s32.totalorder %s18, 1
      %p104 = por %p102, %p103
      %p105 = scmp.ne.s32.totalorder %s94, %s95
      %p106 = scmp.eq.s32.totalorder %s18, 0
      %p107 = por %p105, %p106
      %p108 = scmp.ne.s32.totalorder %s94, %s95
      %p109 = scmp.eq.s32.totalorder %s19, 1
      %p110 = por %p108, %p109
      %p112 = scmp.ne.s32.totalorder %s95, %s111
      %p113 = scmp.eq.s32.totalorder %s19, 0
      %p114 = por %p112, %p113
      %p115 = scmp.le.s32.totalorder 1, %s13
      %p116 = scmp.lt.s32.totalorder %s13, 3
      %p117 = pnand %p115, %p116
      %p118 = pneg %p117
      // Predicated region
      $region9: #{tpu_custom_call.1} parent=5 // pred_check
        _
      $region10: #{tpu_custom_call.1} parent=5 // pred_check_branch
        %120 = sbr.rel (%p117) target = $region12
      $region11: #{tpu_custom_call.1} parent=5 // pred_region
        %s121 = ssub.s32 %s13, 1
        // Predicated region
        $region13: #{tpu_custom_call.1} parent=11 // pred_check
          %p122 = pneg %p60
        $region14: #{tpu_custom_call.1} parent=11 // pred_check_branch
          %124 = sbr.rel (%p122) target = $region16
        $region15: #{tpu_custom_call.1} parent=11 // pred_region
          _
        $region16: #{tpu_custom_call.1} parent=11 // pred_fallthru
          _
        // Predicated region
        $region17: #{tpu_custom_call.1} parent=11 // pred_check
          %p125 = pneg %p81
        $region18: #{tpu_custom_call.1} parent=11 // pred_check_branch
          %127 = sbr.rel (%p125) target = $region20
        $region19: #{tpu_custom_call.1} parent=11 // pred_region
          _
        $region20: #{tpu_custom_call.1} parent=11 // pred_fallthru
          _
      $region12: #{tpu_custom_call.1} parent=5 // pred_fallthru
        _
      %p128 = scmp.lt.s32.totalorder %s13, 2
      // Predicated region
      $region21: #{tpu_custom_call.1} parent=5 // pred_check
        %p129 = pneg %p128
      $region22: #{tpu_custom_call.1} parent=5 // pred_check_branch
        %131 = sbr.rel (%p129) target = $region24
      $region23: #{tpu_custom_call.1} parent=5 // pred_region
        // Predicated region
        $region25: #{tpu_custom_call.1} parent=23 // pred_check
          %p132 = pneg %p33
        $region26: #{tpu_custom_call.1} parent=23 // pred_check_branch
          %134 = sbr.rel (%p132) target = $region28
        $region27: #{tpu_custom_call.1} parent=23 // pred_region
          %s135 = sand.u32 %s23, 1
          %s136 = scalar_lea.sflag [#allocation4], %s135
          %s137 = sand.u32 %s23, 1
          %s138 = smul.addr %s137, 456
          %s139 = scalar_lea.vmem [#allocation3], %s138
          %s140 = smul.u32 19, %s13
          %s142 = ssub.s32 7296, 7296
          %143 = vsyncadd %s136, %s142
          %s144 = smul.addr %s140, 6
          %s145 = smul.addr %s144, 64
          %s146 = scalar_lea.hbm %s0, %s145
          %s147 = sshll.u32 %s139, 4
          %s148 = int_to_ptr.vmem [resolvable:$true] %s147
          %153 = dma.hbm_to_vmem [thread:$0]  %s146, 7296, %s148, %s136, 384, 384, 24
        $region28: #{tpu_custom_call.1} parent=23 // pred_fallthru
          _
      $region24: #{tpu_custom_call.1} parent=5 // pred_fallthru
        _
      %p154 = scmp.le.s32.totalorder 1, %s13
      %p155 = scmp.lt.s32.totalorder %s13, 3
      %p156 = pnand %p154, %p155
      %p157 = pneg %p156
      // Predicated region
      $region29: #{tpu_custom_call.1} parent=5 // pred_check
        _
      $region30: #{tpu_custom_call.1} parent=5 // pred_check_branch
        %159 = sbr.rel (%p156) target = $region32
      $region31: #{tpu_custom_call.1} parent=5 // pred_region
        %s160 = ssub.s32 %s13, 1
        %s161 = sand.u32 %s26, 1
        %s162 = scalar_lea.sflag [#allocation4], %s161
        %s163 = sand.u32 %s26, 1
        %s164 = smul.addr %s163, 456
        %s165 = scalar_lea.vmem [#allocation3], %s164
        // Predicated region
        $region33: #{tpu_custom_call.1} parent=31 // pred_check
          %p166 = pneg %p39
        $region34: #{tpu_custom_call.1} parent=31 // pred_check_branch
          %168 = sbr.rel (%p166) target = $region36
        $region35: #{tpu_custom_call.1} parent=31 // pred_region
          %169 = dma.done %s162, 7296
        $region36: #{tpu_custom_call.1} parent=31 // pred_fallthru
          _
        %s170 = sand.u32 %s26, 1
        %s171 = scalar_lea.sflag [#allocation4], %s170
        %s172 = sand.u32 %s26, 1
        %s173 = smul.addr %s172, 456
        %s174 = scalar_lea.vmem [#allocation3], %s173
        %p175 = pneg %p39
        %p176 = pneg %p36
        %p177 = pneg %p60
        %p178 = pneg %p57
        %p179 = pneg %p81
        %p180 = pneg %p78
        %p181 = pneg %p107
        %p182 = pneg %p104
        %s183 = smul.u32 19, %s18
        %p184 = scmp.lt.s32.totalorder %s183, 37
        %s185 = scalar_select %p184, %s183, 37
        %s186 = smul.addr %s185, 8
        %s187 = scalar_lea.vmem %s3, %s186
        %s188 = smul.u32 19, %s18
        %s189 = smul.u32 19, %s18
        %p190 = scmp.lt.s32.totalorder %s189, 37
        %s191 = scalar_select %p190, %s189, 37
        %s192 = smul.addr %s191, 8
        %s193 = scalar_lea.vmem %s3, %s192
        %s194 = smul.u32 19, %s18
        %v195 = vld [vmem:[%s165] sm:$0xff]
        %v196 = vld [vmem:[%s165 + $0x8] sm:$0xff]
        %v197 = vld [vmem:[%s165 + $0x10] sm:$0xff]
        %v198 = vld [vmem:[%s165 + $0x18] sm:$0xff]
        %v199 = vld [vmem:[%s165 + $0x20] sm:$0xff]
        %v200 = vld [vmem:[%s165 + $0x28] sm:$0xff]
        %v201 = vld [vmem:[%s165 + $0x30] sm:$0xff]
        %v202 = vld [vmem:[%s165 + $0x38] sm:$0xff]
        %v203 = vld [vmem:[%s165 + $0x40] sm:$0xff]
        %v204 = vld [vmem:[%s165 + $0x48] sm:$0xff]
        %v205 = vld [vmem:[%s165 + $0x50] sm:$0xff]
        %v206 = vld [vmem:[%s165 + $0x58] sm:$0xff]
        %v207 = vld [vmem:[%s165 + $0x60] sm:$0xff]
        %v208 = vld [vmem:[%s165 + $0x68] sm:$0xff]
        %v209 = vld [vmem:[%s165 + $0x70] sm:$0xff]
        %v210 = vld [vmem:[%s165 + $0x78] sm:$0xff]
        %v211 = vld [vmem:[%s165 + $0x80] sm:$0xff]
        %v212 = vld [vmem:[%s165 + $0x88] sm:$0xff]
        %v213 = vld [vmem:[%s165 + $0x90] sm:$0xff]
        %v214 = vld [vmem:[%s165 + $0x98] sm:$0xff]
        %v215 = vld [vmem:[%s165 + $0xa0] sm:$0xff]
        %v216 = vld [vmem:[%s165 + $0xa8] sm:$0xff]
        %v217 = vld [vmem:[%s165 + $0xb0] sm:$0xff]
        %v218 = vld [vmem:[%s165 + $0xb8] sm:$0xff]
        %v219 = vld [vmem:[%s165 + $0xc0] sm:$0xff]
        %v220 = vld [vmem:[%s165 + $0xc8] sm:$0xff]
        %v221 = vld [vmem:[%s165 + $0xd0] sm:$0xff]
        %v222 = vld [vmem:[%s165 + $0xd8] sm:$0xff]
        %v223 = vld [vmem:[%s165 + $0xe0] sm:$0xff]
        %v224 = vld [vmem:[%s165 + $0xe8] sm:$0xff]
        %v225 = vld [vmem:[%s165 + $0xf0] sm:$0xff]
        %v226 = vld [vmem:[%s165 + $0xf8] sm:$0xff]
        %v227 = vld [vmem:[%s165 + $0x100] sm:$0xff]
        %v228 = vld [vmem:[%s165 + $0x108] sm:$0xff]
        %v229 = vld [vmem:[%s165 + $0x110] sm:$0xff]
        %v230 = vld [vmem:[%s165 + $0x118] sm:$0xff]
        %v231 = vld [vmem:[%s165 + $0x120] sm:$0xff]
        %v232 = vld [vmem:[%s165 + $0x128] sm:$0xff]
        %v233 = vld [vmem:[%s165 + $0x130] sm:$0xff]
        %v234 = vld [vmem:[%s165 + $0x138] sm:$0xff]
        %v235 = vld [vmem:[%s165 + $0x140] sm:$0xff]
        %v236 = vld [vmem:[%s165 + $0x148] sm:$0xff]
        %v237 = vld [vmem:[%s165 + $0x150] sm:$0xff]
        %v238 = vld [vmem:[%s165 + $0x158] sm:$0xff]
        %v239 = vld [vmem:[%s165 + $0x160] sm:$0xff]
        %v240 = vld [vmem:[%s165 + $0x168] sm:$0xff]
        %v241 = vld [vmem:[%s165 + $0x170] sm:$0xff]
        %v242 = vld [vmem:[%s165 + $0x178] sm:$0xff]
        %v243 = vld [vmem:[%s165 + $0x180] sm:$0xff]
        %v244 = vld [vmem:[%s165 + $0x188] sm:$0xff]
        %v245 = vld [vmem:[%s165 + $0x190] sm:$0xff]
        %v246 = vld [vmem:[%s165 + $0x198] sm:$0xff]
        %v247 = vld [vmem:[%s165 + $0x1a0] sm:$0xff]
        %v248 = vld [vmem:[%s165 + $0x1a8] sm:$0xff]
        %v249 = vld [vmem:[%s165 + $0x1b0] sm:$0xff]
        %v250 = vld [vmem:[%s165 + $0x1b8] sm:$0xff]
        %v251 = vld [vmem:[%s165 + $0x1c0] sm:$0xff]
        %v252 = vunpack.c.l.bf16 %v195
        %v253 = vunpack.c.h.bf16 %v195
        %v254 = vunpack.c.l.bf16 %v196
        %v255 = vunpack.c.h.bf16 %v196
        %v256 = vunpack.c.l.bf16 %v197
        %v257 = vunpack.c.h.bf16 %v197
        %v258 = vunpack.c.l.bf16 %v198
        %v259 = vunpack.c.h.bf16 %v198
        %v260 = vunpack.c.l.bf16 %v199
        %v261 = vunpack.c.h.bf16 %v199
        %v262 = vunpack.c.l.bf16 %v200
        %v263 = vunpack.c.h.bf16 %v200
        %v264 = vunpack.c.l.bf16 %v201
        %v265 = vunpack.c.h.bf16 %v201
        %v266 = vunpack.c.l.bf16 %v202
        %v267 = vunpack.c.h.bf16 %v202
        %v268 = vunpack.c.l.bf16 %v203
        %v269 = vunpack.c.h.bf16 %v203
        %v270 = vunpack.c.l.bf16 %v204
        %v271 = vunpack.c.h.bf16 %v204
        %v272 = vunpack.c.l.bf16 %v205
        %v273 = vunpack.c.h.bf16 %v205
        %v274 = vunpack.c.l.bf16 %v206
        %v275 = vunpack.c.h.bf16 %v206
        %v276 = vunpack.c.l.bf16 %v207
        %v277 = vunpack.c.h.bf16 %v207
        %v278 = vunpack.c.l.bf16 %v208
        %v279 = vunpack.c.h.bf16 %v208
        %v280 = vunpack.c.l.bf16 %v209
        %v281 = vunpack.c.h.bf16 %v209
        %v282 = vunpack.c.l.bf16 %v210
        %v283 = vunpack.c.h.bf16 %v210
        %v284 = vunpack.c.l.bf16 %v211
        %v285 = vunpack.c.h.bf16 %v211
        %v286 = vunpack.c.l.bf16 %v212
        %v287 = vunpack.c.h.bf16 %v212
        %v288 = vunpack.c.l.bf16 %v213
        %v289 = vunpack.c.h.bf16 %v213
        %v290 = vunpack.c.l.bf16 %v214
        %v291 = vunpack.c.h.bf16 %v214
        %v292 = vunpack.c.l.bf16 %v215
        %v293 = vunpack.c.h.bf16 %v215
        %v294 = vunpack.c.l.bf16 %v216
        %v295 = vunpack.c.h.bf16 %v216
        %v296 = vunpack.c.l.bf16 %v217
        %v297 = vunpack.c.h.bf16 %v217
        %v298 = vunpack.c.l.bf16 %v218
        %v299 = vunpack.c.h.bf16 %v218
        %v300 = vunpack.c.l.bf16 %v219
        %v301 = vunpack.c.h.bf16 %v219
        %v302 = vunpack.c.l.bf16 %v220
        %v303 = vunpack.c.h.bf16 %v220
        %v304 = vunpack.c.l.bf16 %v221
        %v305 = vunpack.c.h.bf16 %v221
        %v306 = vunpack.c.l.bf16 %v222
        %v307 = vunpack.c.h.bf16 %v222
        %v308 = vunpack.c.l.bf16 %v223
        %v309 = vunpack.c.h.bf16 %v223
        %v310 = vunpack.c.l.bf16 %v224
        %v311 = vunpack.c.h.bf16 %v224
        %v312 = vunpack.c.l.bf16 %v225
        %v313 = vunpack.c.h.bf16 %v225
        %v314 = vunpack.c.l.bf16 %v226
        %v315 = vunpack.c.h.bf16 %v226
        %v316 = vunpack.c.l.bf16 %v227
        %v317 = vunpack.c.h.bf16 %v227
        %v318 = vunpack.c.l.bf16 %v228
        %v319 = vunpack.c.h.bf16 %v228
        %v320 = vunpack.c.l.bf16 %v229
        %v321 = vunpack.c.h.bf16 %v229
        %v322 = vunpack.c.l.bf16 %v230
        %v323 = vunpack.c.h.bf16 %v230
        %v324 = vunpack.c.l.bf16 %v231
        %v325 = vunpack.c.h.bf16 %v231
        %v326 = vunpack.c.l.bf16 %v232
        %v327 = vunpack.c.h.bf16 %v232
        %v328 = vunpack.c.l.bf16 %v233
        %v329 = vunpack.c.h.bf16 %v233
        %v330 = vunpack.c.l.bf16 %v234
        %v331 = vunpack.c.h.bf16 %v234
        %v332 = vunpack.c.l.bf16 %v235
        %v333 = vunpack.c.h.bf16 %v235
        %v334 = vunpack.c.l.bf16 %v236
        %v335 = vunpack.c.h.bf16 %v236
        %v336 = vunpack.c.l.bf16 %v237
        %v337 = vunpack.c.h.bf16 %v237
        %v338 = vunpack.c.l.bf16 %v238
        %v339 = vunpack.c.h.bf16 %v238
        %v340 = vunpack.c.l.bf16 %v239
        %v341 = vunpack.c.h.bf16 %v239
        %v342 = vunpack.c.l.bf16 %v240
        %v343 = vunpack.c.h.bf16 %v240
        %v344 = vunpack.c.l.bf16 %v241
        %v345 = vunpack.c.h.bf16 %v241
        %v346 = vunpack.c.l.bf16 %v242
        %v347 = vunpack.c.h.bf16 %v242
        %v348 = vunpack.c.l.bf16 %v243
        %v349 = vunpack.c.h.bf16 %v243
        %v350 = vunpack.c.l.bf16 %v244
        %v351 = vunpack.c.h.bf16 %v244
        %v352 = vunpack.c.l.bf16 %v245
        %v353 = vunpack.c.h.bf16 %v245
        %v354 = vunpack.c.l.bf16 %v246
        %v355 = vunpack.c.h.bf16 %v246
        %v356 = vunpack.c.l.bf16 %v247
        %v357 = vunpack.c.h.bf16 %v247
        %v358 = vunpack.c.l.bf16 %v248
        %v359 = vunpack.c.h.bf16 %v248
        %v360 = vunpack.c.l.bf16 %v249
        %v361 = vunpack.c.h.bf16 %v249
        %v362 = vunpack.c.l.bf16 %v250
        %v363 = vunpack.c.h.bf16 %v250
        %v364 = vunpack.c.l.bf16 %v251
        %v365 = vunpack.c.h.bf16 %v251
        %v366 = vld [vmem:[%s1] sm:$0x3f]
        %v368 = vlaneseq
        %v369 = vshrl.u32 %v368, 7
        %v370 = vsub.s32 0, %v369
        %v371 = vrot.slane %v366, %v370
        %v372 = vlaneseq
        %v373 = vshrl.u32 %v372, 7
        %v374 = vsub.s32 1, %v373
        %v375 = vrot.slane %v366, %v374
        %v376 = vlaneseq
        %v377 = vshrl.u32 %v376, 7
        %v378 = vsub.s32 2, %v377
        %v379 = vrot.slane %v366, %v378
        %v380 = vlaneseq
        %v381 = vshrl.u32 %v380, 7
        %v382 = vsub.s32 3, %v381
        %v383 = vrot.slane %v366, %v382
        %v384 = vlaneseq
        %v385 = vshrl.u32 %v384, 7
        %v386 = vsub.s32 4, %v385
        %v387 = vrot.slane %v366, %v386
        %v388 = vlaneseq
        %v389 = vshrl.u32 %v388, 7
        %v390 = vsub.s32 5, %v389
        %v391 = vrot.slane %v366, %v390
        %v398 = vmul.f32 %v252, %v371
        %v399 = vmul.f32 %v253, %v375
        %v400 = vmul.f32 %v254, %v379
        %v401 = vmul.f32 %v255, %v383
        %v402 = vmul.f32 %v256, %v387
        %v403 = vmul.f32 %v257, %v391
        %v404 = vmul.f32 %v258, %v371
        %v405 = vmul.f32 %v259, %v375
        %v406 = vmul.f32 %v260, %v379
        %v407 = vmul.f32 %v261, %v383
        %v408 = vmul.f32 %v262, %v387
        %v409 = vmul.f32 %v263, %v391
        %v410 = vmul.f32 %v264, %v371
        %v411 = vmul.f32 %v265, %v375
        %v412 = vmul.f32 %v266, %v379
        %v413 = vmul.f32 %v267, %v383
        %v414 = vmul.f32 %v268, %v387
        %v415 = vmul.f32 %v269, %v391
        %v416 = vmul.f32 %v270, %v371
        %v417 = vmul.f32 %v271, %v375
        %v418 = vmul.f32 %v272, %v379
        %v419 = vmul.f32 %v273, %v383
        %v420 = vmul.f32 %v274, %v387
        %v421 = vmul.f32 %v275, %v391
        %v422 = vmul.f32 %v276, %v371
        %v423 = vmul.f32 %v277, %v375
        %v424 = vmul.f32 %v278, %v379
        %v425 = vmul.f32 %v279, %v383
        %v426 = vmul.f32 %v280, %v387
        %v427 = vmul.f32 %v281, %v391
        %v428 = vmul.f32 %v282, %v371
        %v429 = vmul.f32 %v283, %v375
        %v430 = vmul.f32 %v284, %v379
        %v431 = vmul.f32 %v285, %v383
        %v432 = vmul.f32 %v286, %v387
        %v433 = vmul.f32 %v287, %v391
        %v434 = vmul.f32 %v288, %v371
        %v435 = vmul.f32 %v289, %v375
        %v436 = vmul.f32 %v290, %v379
        %v437 = vmul.f32 %v291, %v383
        %v438 = vmul.f32 %v292, %v387
        %v439 = vmul.f32 %v293, %v391
        %v440 = vmul.f32 %v294, %v371
        %v441 = vmul.f32 %v295, %v375
        %v442 = vmul.f32 %v296, %v379
        %v443 = vmul.f32 %v297, %v383
        %v444 = vmul.f32 %v298, %v387
        %v445 = vmul.f32 %v299, %v391
        %v446 = vmul.f32 %v300, %v371
        %v447 = vmul.f32 %v301, %v375
        %v448 = vmul.f32 %v302, %v379
        %v449 = vmul.f32 %v303, %v383
        %v450 = vmul.f32 %v304, %v387
        %v451 = vmul.f32 %v305, %v391
        %v452 = vmul.f32 %v306, %v371
        %v453 = vmul.f32 %v307, %v375
        %v454 = vmul.f32 %v308, %v379
        %v455 = vmul.f32 %v309, %v383
        %v456 = vmul.f32 %v310, %v387
        %v457 = vmul.f32 %v311, %v391
        %v458 = vmul.f32 %v312, %v371
        %v459 = vmul.f32 %v313, %v375
        %v460 = vmul.f32 %v314, %v379
        %v461 = vmul.f32 %v315, %v383
        %v462 = vmul.f32 %v316, %v387
        %v463 = vmul.f32 %v317, %v391
        %v464 = vmul.f32 %v318, %v371
        %v465 = vmul.f32 %v319, %v375
        %v466 = vmul.f32 %v320, %v379
        %v467 = vmul.f32 %v321, %v383
        %v468 = vmul.f32 %v322, %v387
        %v469 = vmul.f32 %v323, %v391
        %v470 = vmul.f32 %v324, %v371
        %v471 = vmul.f32 %v325, %v375
        %v472 = vmul.f32 %v326, %v379
        %v473 = vmul.f32 %v327, %v383
        %v474 = vmul.f32 %v328, %v387
        %v475 = vmul.f32 %v329, %v391
        %v476 = vmul.f32 %v330, %v371
        %v477 = vmul.f32 %v331, %v375
        %v478 = vmul.f32 %v332, %v379
        %v479 = vmul.f32 %v333, %v383
        %v480 = vmul.f32 %v334, %v387
        %v481 = vmul.f32 %v335, %v391
        %v482 = vmul.f32 %v336, %v371
        %v483 = vmul.f32 %v337, %v375
        %v484 = vmul.f32 %v338, %v379
        %v485 = vmul.f32 %v339, %v383
        %v486 = vmul.f32 %v340, %v387
        %v487 = vmul.f32 %v341, %v391
        %v488 = vmul.f32 %v342, %v371
        %v489 = vmul.f32 %v343, %v375
        %v490 = vmul.f32 %v344, %v379
        %v491 = vmul.f32 %v345, %v383
        %v492 = vmul.f32 %v346, %v387
        %v493 = vmul.f32 %v347, %v391
        %v494 = vmul.f32 %v348, %v371
        %v495 = vmul.f32 %v349, %v375
        %v496 = vmul.f32 %v350, %v379
        %v497 = vmul.f32 %v351, %v383
        %v498 = vmul.f32 %v352, %v387
        %v499 = vmul.f32 %v353, %v391
        %v500 = vmul.f32 %v354, %v371
        %v501 = vmul.f32 %v355, %v375
        %v502 = vmul.f32 %v356, %v379
        %v503 = vmul.f32 %v357, %v383
        %v504 = vmul.f32 %v358, %v387
        %v505 = vmul.f32 %v359, %v391
        %v506 = vmul.f32 %v360, %v371
        %v507 = vmul.f32 %v361, %v375
        %v508 = vmul.f32 %v362, %v379
        %v509 = vmul.f32 %v363, %v383
        %v510 = vmul.f32 %v364, %v387
        %v511 = vmul.f32 %v365, %v391
        %v512 = vadd.f32 %v398, %v399
        %v513 = vadd.f32 %v512, %v400
        %v514 = vadd.f32 %v513, %v401
        %v515 = vadd.f32 %v514, %v402
        %v516 = vadd.f32 %v515, %v403
        %517 = vadd.xlane.f32.xlu0 %v516
        %v518 = vpop.xlane.xlu0 %517
        %v519 = vadd.f32 %v404, %v405
        %v520 = vadd.f32 %v519, %v406
        %v521 = vadd.f32 %v520, %v407
        %v522 = vadd.f32 %v521, %v408
        %v523 = vadd.f32 %v522, %v409
        %524 = vadd.xlane.f32.xlu0 %v523
        %v525 = vpop.xlane.xlu0 %524
        %v526 = vadd.f32 %v410, %v411
        %v527 = vadd.f32 %v526, %v412
        %v528 = vadd.f32 %v527, %v413
        %v529 = vadd.f32 %v528, %v414
        %v530 = vadd.f32 %v529, %v415
        %531 = vadd.xlane.f32.xlu0 %v530
        %v532 = vpop.xlane.xlu0 %531
        %v533 = vadd.f32 %v416, %v417
        %v534 = vadd.f32 %v533, %v418
        %v535 = vadd.f32 %v534, %v419
        %v536 = vadd.f32 %v535, %v420
        %v537 = vadd.f32 %v536, %v421
        %538 = vadd.xlane.f32.xlu0 %v537
        %v539 = vpop.xlane.xlu0 %538
        %v540 = vadd.f32 %v422, %v423
        %v541 = vadd.f32 %v540, %v424
        %v542 = vadd.f32 %v541, %v425
        %v543 = vadd.f32 %v542, %v426
        %v544 = vadd.f32 %v543, %v427
        %545 = vadd.xlane.f32.xlu0 %v544
        %v546 = vpop.xlane.xlu0 %545
        %v547 = vadd.f32 %v428, %v429
        %v548 = vadd.f32 %v547, %v430
        %v549 = vadd.f32 %v548, %v431
        %v550 = vadd.f32 %v549, %v432
        %v551 = vadd.f32 %v550, %v433
        %552 = vadd.xlane.f32.xlu0 %v551
        %v553 = vpop.xlane.xlu0 %552
        %v554 = vadd.f32 %v434, %v435
        %v555 = vadd.f32 %v554, %v436
        %v556 = vadd.f32 %v555, %v437
        %v557 = vadd.f32 %v556, %v438
        %v558 = vadd.f32 %v557, %v439
        %559 = vadd.xlane.f32.xlu0 %v558
        %v560 = vpop.xlane.xlu0 %559
        %v561 = vadd.f32 %v440, %v441
        %v562 = vadd.f32 %v561, %v442
        %v563 = vadd.f32 %v562, %v443
        %v564 = vadd.f32 %v563, %v444
        %v565 = vadd.f32 %v564, %v445
        %566 = vadd.xlane.f32.xlu0 %v565
        %v567 = vpop.xlane.xlu0 %566
        %v568 = vadd.f32 %v446, %v447
        %v569 = vadd.f32 %v568, %v448
        %v570 = vadd.f32 %v569, %v449
        %v571 = vadd.f32 %v570, %v450
        %v572 = vadd.f32 %v571, %v451
        %573 = vadd.xlane.f32.xlu0 %v572
        %v574 = vpop.xlane.xlu0 %573
        %v575 = vadd.f32 %v452, %v453
        %v576 = vadd.f32 %v575, %v454
        %v577 = vadd.f32 %v576, %v455
        %v578 = vadd.f32 %v577, %v456
        %v579 = vadd.f32 %v578, %v457
        %580 = vadd.xlane.f32.xlu0 %v579
        %v581 = vpop.xlane.xlu0 %580
        %v582 = vadd.f32 %v458, %v459
        %v583 = vadd.f32 %v582, %v460
        %v584 = vadd.f32 %v583, %v461
        %v585 = vadd.f32 %v584, %v462
        %v586 = vadd.f32 %v585, %v463
        %587 = vadd.xlane.f32.xlu0 %v586
        %v588 = vpop.xlane.xlu0 %587
        %v589 = vadd.f32 %v464, %v465
        %v590 = vadd.f32 %v589, %v466
        %v591 = vadd.f32 %v590, %v467
        %v592 = vadd.f32 %v591, %v468
        %v593 = vadd.f32 %v592, %v469
        %594 = vadd.xlane.f32.xlu0 %v593
        %v595 = vpop.xlane.xlu0 %594
        %v596 = vadd.f32 %v470, %v471
        %v597 = vadd.f32 %v596, %v472
        %v598 = vadd.f32 %v597, %v473
        %v599 = vadd.f32 %v598, %v474
        %v600 = vadd.f32 %v599, %v475
        %601 = vadd.xlane.f32.xlu0 %v600
        %v602 = vpop.xlane.xlu0 %601
        %v603 = vadd.f32 %v476, %v477
        %v604 = vadd.f32 %v603, %v478
        %v605 = vadd.f32 %v604, %v479
        %v606 = vadd.f32 %v605, %v480
        %v607 = vadd.f32 %v606, %v481
        %608 = vadd.xlane.f32.xlu0 %v607
        %v609 = vpop.xlane.xlu0 %608
        %v610 = vadd.f32 %v482, %v483
        %v611 = vadd.f32 %v610, %v484
        %v612 = vadd.f32 %v611, %v485
        %v613 = vadd.f32 %v612, %v486
        %v614 = vadd.f32 %v613, %v487
        %615 = vadd.xlane.f32.xlu0 %v614
        %v616 = vpop.xlane.xlu0 %615
        %v617 = vadd.f32 %v488, %v489
        %v618 = vadd.f32 %v617, %v490
        %v619 = vadd.f32 %v618, %v491
        %v620 = vadd.f32 %v619, %v492
        %v621 = vadd.f32 %v620, %v493
        %622 = vadd.xlane.f32.xlu0 %v621
        %v623 = vpop.xlane.xlu0 %622
        %v624 = vadd.f32 %v494, %v495
        %v625 = vadd.f32 %v624, %v496
        %v626 = vadd.f32 %v625, %v497
        %v627 = vadd.f32 %v626, %v498
        %v628 = vadd.f32 %v627, %v499
        %629 = vadd.xlane.f32.xlu0 %v628
        %v630 = vpop.xlane.xlu0 %629
        %v631 = vadd.f32 %v500, %v501
        %v632 = vadd.f32 %v631, %v502
        %v633 = vadd.f32 %v632, %v503
        %v634 = vadd.f32 %v633, %v504
        %v635 = vadd.f32 %v634, %v505
        %636 = vadd.xlane.f32.xlu0 %v635
        %v637 = vpop.xlane.xlu0 %636
        %v638 = vadd.f32 %v506, %v507
        %v639 = vadd.f32 %v638, %v508
        %v640 = vadd.f32 %v639, %v509
        %v641 = vadd.f32 %v640, %v510
        %v642 = vadd.f32 %v641, %v511
        %643 = vadd.xlane.f32.xlu0 %v642
        %v644 = vpop.xlane.xlu0 %643
        %s645 = sld [smem:[#allocation2]]
        %v646 = vstv %s645
        %v647 = vadd.f32 %v518, %v646
        %v648 = vadd.f32 %v525, %v646
        %v649 = vadd.f32 %v532, %v646
        %v650 = vadd.f32 %v539, %v646
        %v651 = vadd.f32 %v546, %v646
        %v652 = vadd.f32 %v553, %v646
        %v653 = vadd.f32 %v560, %v646
        %v654 = vadd.f32 %v567, %v646
        %v655 = vadd.f32 %v574, %v646
        %v656 = vadd.f32 %v581, %v646
        %v657 = vadd.f32 %v588, %v646
        %v658 = vadd.f32 %v595, %v646
        %v659 = vadd.f32 %v602, %v646
        %v660 = vadd.f32 %v609, %v646
        %v661 = vadd.f32 %v616, %v646
        %v662 = vadd.f32 %v623, %v646
        %v663 = vadd.f32 %v630, %v646
        %v664 = vadd.f32 %v637, %v646
        %v665 = vadd.f32 %v644, %v646
        %vm666 = vcmask 7168
        %667 = vst.msk [vmem:[%s193] sm:$0xff] %vm666, %v647
        %668 = vst.msk [vmem:[%s193 + $0x8] sm:$0xff] %vm666, %v648
        %669 = vst.msk [vmem:[%s193 + $0x10] sm:$0xff] %vm666, %v649
        %670 = vst.msk [vmem:[%s193 + $0x18] sm:$0xff] %vm666, %v650
        %671 = vst.msk [vmem:[%s193 + $0x20] sm:$0xff] %vm666, %v651
        %672 = vst.msk [vmem:[%s193 + $0x28] sm:$0xff] %vm666, %v652
        %673 = vst.msk [vmem:[%s193 + $0x30] sm:$0xff] %vm666, %v653
        %674 = vst.msk [vmem:[%s193 + $0x38] sm:$0xff] %vm666, %v654
        %675 = vst.msk [vmem:[%s193 + $0x40] sm:$0xff] %vm666, %v655
        %676 = vst.msk [vmem:[%s193 + $0x48] sm:$0xff] %vm666, %v656
        %677 = vst.msk [vmem:[%s193 + $0x50] sm:$0xff] %vm666, %v657
        %678 = vst.msk [vmem:[%s193 + $0x58] sm:$0xff] %vm666, %v658
        %679 = vst.msk [vmem:[%s193 + $0x60] sm:$0xff] %vm666, %v659
        %680 = vst.msk [vmem:[%s193 + $0x68] sm:$0xff] %vm666, %v660
        %681 = vst.msk [vmem:[%s193 + $0x70] sm:$0xff] %vm666, %v661
        %682 = vst.msk [vmem:[%s193 + $0x78] sm:$0xff] %vm666, %v662
        %683 = vst.msk [vmem:[%s193 + $0x80] sm:$0xff] %vm666, %v663
        %684 = vst.msk [vmem:[%s193 + $0x88] sm:$0xff] %vm666, %v664
        %685 = vst.msk [vmem:[%s193 + $0x90] sm:$0xff] %vm666, %v665
        %s686 = smul.u32 19, %s18
        %p687 = scmp.lt.s32.totalorder %s686, 37
        %s688 = scalar_select %p687, %s686, 37
        %s689 = smul.addr %s688, 8
        %s690 = scalar_lea.vmem %s3, %s689
        // Predicated region
        $region37: #{tpu_custom_call.1} parent=31 // pred_check
          %p691 = pneg %p104
        $region38: #{tpu_custom_call.1} parent=31 // pred_check_branch
          %693 = sbr.rel (%p691) target = $region40
        $region39: #{tpu_custom_call.1} parent=31 // pred_region
          %s694 = smul.u32 19, %s18
        $region40: #{tpu_custom_call.1} parent=31 // pred_fallthru
          _
      $region32: #{tpu_custom_call.1} parent=5 // pred_fallthru
        _
      %p695 = scmp.le.s32.totalorder 2, %s13
      // Predicated region
      $region41: #{tpu_custom_call.1} parent=5 // pred_check
        %p696 = pneg %p695
      $region42: #{tpu_custom_call.1} parent=5 // pred_check_branch
        %698 = sbr.rel (%p696) target = $region44
      $region43: #{tpu_custom_call.1} parent=5 // pred_region
        %s699 = ssub.s32 %s13, 2
        // Predicated region
        $region45: #{tpu_custom_call.1} parent=43 // pred_check
          %p700 = pneg %p110
        $region46: #{tpu_custom_call.1} parent=43 // pred_check_branch
          %702 = sbr.rel (%p700) target = $region48
        $region47: #{tpu_custom_call.1} parent=43 // pred_region
          %s703 = smul.u32 19, %s19
          %p704 = scmp.lt.s32.totalorder %s703, 37
          %s705 = scalar_select %p704, %s703, 37
          %s706 = smul.addr %s705, 8
          %s707 = scalar_lea.vmem %s3, %s706
        $region48: #{tpu_custom_call.1} parent=43 // pred_fallthru
          _
      $region44: #{tpu_custom_call.1} parent=5 // pred_fallthru
        _
    $region6: #{tpu_custom_call.1} parent=1 // loop_footer
      %s17 = sadd.s32 1, %s13
    $region7: #{tpu_custom_call.1} parent=1 // loop_footer_branch
      %12 = sbr.rel target = $region3
    $region8: #{tpu_custom_call.1} parent=1 // loop_exit
      _
    %708 = vsyncpa [#allocation4], 1
    %s709 = scalar_lea.sflag [#allocation4], 1
    %710 = vsyncpa %s709, 1

</llo_original>
